<compile_context>
chip_gen: v6e
topology: v6e:2x2x1
jax: 0.10.0
libtpu: 0.0.40
codegen_flags: <defaults>
</compile_context>

<pallas_src>
import math

import jax
import jax.numpy as jnp
from jax import lax
from jax.experimental import pallas as pl
from jax.experimental.pallas import tpu as pltpu


def _nbytes(shape, dtype):
    return math.prod(shape) * jnp.dtype(dtype).itemsize


def _vmem_limit_bytes(resident_bytes):
    # actual residency + pipelining/scratch headroom, clamped to sane bounds
    return int(min(100 * (1 << 20), max(32 * (1 << 20), 2 * resident_bytes + (4 << 20))))


def _full_spec(shape):
    # grid=() full-array block, resident in VMEM (single buffer, no pipelining)
    return pl.BlockSpec(shape, lambda: (0,) * len(shape),
                        memory_space=pltpu.MemorySpace.VMEM)


# ----------------------------------------------------------------------------
# One-time parameter preparation (do NOT call per step / per timestep).
# ----------------------------------------------------------------------------
def prepare_gru_params(weight_ih, weight_hh, bias_ih, bias_hh, *,
                       param_dtype=jnp.float32):
    """Transpose weights to (in, 3H)/(H, 3H), fold biases, cast weights.

    param_dtype=jnp.bfloat16 is recommended on v6e/v7x (native MXU input dtype,
    halves weight HBM traffic and VMEM residency); accumulation and all
    elementwise math stay f32 either way.
    """
    H = weight_hh.shape[-1]
    w_ih_t = jnp.transpose(weight_ih).astype(param_dtype)        # (in, 3H)
    w_hh_t = jnp.transpose(weight_hh).astype(param_dtype)        # (H, 3H)
    b_sum = (bias_ih + bias_hh).astype(jnp.float32)
    b_in = bias_ih[2 * H:].astype(jnp.float32)                   # n-gate input bias
    b_hn = bias_hh[2 * H:].astype(jnp.float32)                   # n-gate hidden bias
    # Bias for the hoisted projection: r/z gates get b_ih+b_hh (fully foldable),
    # the n gate only b_ih (b_hh_n is scaled by r inside the recurrence).
    b_gi = jnp.concatenate([b_sum[:2 * H], b_in])
    return dict(
        w_ih_t=w_ih_t,
        w_hh_t=w_hh_t,
        b_gi=b_gi.reshape(1, 3 * H),           # hoisted-projection bias
        b_rz=b_sum[:2 * H].reshape(1, 2 * H),   # single-step-cell folded r/z bias
        b_in=b_in.reshape(1, H),
        b_hn=b_hn.reshape(1, H),
    )


# ----------------------------------------------------------------------------
# Single-step cell (== MetaGRUCell.forward).  For sequences, ALWAYS prefer
# meta_gru_sequence: every separate cell call re-DMAs both weight matrices.
# ----------------------------------------------------------------------------
def _gru_cell_kernel(x_ref, h_ref, wih_ref, whh_ref, brz_ref, bin_ref, bhn_ref,
                     o_ref):
    H = h_ref.shape[-1]
    mxu = wih_ref.dtype
    h = h_ref[...].astype(jnp.float32)
    gi = jnp.dot(x_ref[...].astype(mxu), wih_ref[...],
                 preferred_element_type=jnp.float32)             # (B, 3H)
    gh = jnp.dot(h_ref[...].astype(mxu), whh_ref[...],
                 preferred_element_type=jnp.float32)             # (B, 3H)
    rz = jax.nn.sigmoid(gi[:, :2 * H] + gh[:, :2 * H] + brz_ref[...])
    r, z = rz[:, :H], rz[:, H:]
    n = jnp.tanh(gi[:, 2 * H:] + bin_ref[...] + r * (gh[:, 2 * H:] + bhn_ref[...]))
    o_ref[...] = (n + z * (h - n)).astype(o_ref.dtype)           # == (1-z)*n + z*h


def meta_gru_cell(x, hx, params, *, donate_hidden=False):
    """One GRU-cell step. params comes from prepare_gru_params()."""
    B, in_size = x.shape
    H = hx.shape[-1]
    assert H % 128 == 0, "hidden_size must be a multiple of 128 (lane alignment)"

    est = (_nbytes((B, in_size), x.dtype) + 2 * _nbytes((B, H), hx.dtype)
           + _nbytes((in_size, 3 * H), params["w_ih_t"].dtype)
           + _nbytes((H, 3 * H), params["w_hh_t"].dtype))

    return pl.pallas_call(
        _gru_cell_kernel,
        out_shape=jax.ShapeDtypeStruct((B, H), hx.dtype),
        grid_spec=pl.GridSpec(
            grid=(),
            in_specs=[
                _full_spec((B, in_size)),        # x
                _full_spec((B, H)),              # hx
                _full_spec((in_size, 3 * H)),    # W_ih^T
                _full_spec((H, 3 * H)),          # W_hh^T
                _full_spec((1, 2 * H)),          # folded r/z bias
                _full_spec((1, H)),              # b_ih_n
                _full_spec((1, H)),              # b_hh_n
            ],
            out_specs=_full_spec((B, H)),
        ),
        compiler_params=pltpu.CompilerParams(
            vmem_limit_bytes=_vmem_limit_bytes(est)),
        # Only saves the (B, H) HBM allocation if the caller really donates hx
        # (jax.jit donate_argnums) and never reads hx afterwards.
        input_output_aliases=({1: 0} if donate_hidden else {}),
    )(x, hx, params["w_ih_t"], params["w_hh_t"],
      params["b_rz"], params["b_in"], params["b_hn"])


# ----------------------------------------------------------------------------
# Stage 1: hoisted input projection across all T timesteps (one MXU matmul,
# M = T*B instead of M = B, biases folded).
# ----------------------------------------------------------------------------
def _input_proj_kernel(x_ref, w_ref, b_ref, o_ref):
    gi = jnp.dot(x_ref[...].astype(w_ref.dtype), w_ref[...],
                 preferred_element_type=jnp.float32)
    o_ref[...] = (gi + b_ref[...]).astype(o_ref.dtype)


def _input_projection(x2d, params):
    # Single full block: at this module's shapes (T*B, in, 3H are small) the
    # whole matmul fits VMEM comfortably; at large T*B one would tile the row
    # axis on a "parallel" grid.
    rows, in_size = x2d.shape
    H3 = params["w_ih_t"].shape[-1]
    est = (_nbytes((rows, in_size), x2d.dtype)
           + _nbytes((in_size, H3), params["w_ih_t"].dtype)
           + _nbytes((rows, H3), jnp.float32))
    return pl.pallas_call(
        _input_proj_kernel,
        out_shape=jax.ShapeDtypeStruct((rows, H3), jnp.float32),
        grid_spec=pl.GridSpec(
            grid=(),
            in_specs=[_full_spec((rows, in_size)),
                      _full_spec((in_size, H3)),
                      _full_spec((1, H3))],
            out_specs=_full_spec((rows, H3)),
        ),
        compiler_params=pltpu.CompilerParams(
            vmem_limit_bytes=_vmem_limit_bytes(est)),
    )(x2d, params["w_ih_t"], params["b_gi"])


# ----------------------------------------------------------------------------
# Stage 2: fused recurrence.  Whole T-step loop inside ONE kernel invocation,
# W_hh^T / gi / hseq VMEM-resident, hidden state carried as a loop value.
# ----------------------------------------------------------------------------
def _gru_seq_kernel(gi_ref, h0_ref, whh_ref, bhn_ref, hseq_ref):
    T, Bt, _ = gi_ref.shape
    H = h0_ref.shape[-1]
    mxu = whh_ref.dtype
    # Hoisted out of the time loop (JAX does not CSE broadcast_in_dim).
    b_hn = jnp.broadcast_to(bhn_ref[...], (Bt, H))

    def step(t, h):
        gi = gi_ref[t]                                            # (Bt, 3H), biases folded
        gh = jnp.dot(h.astype(mxu), whh_ref[...],
                     preferred_element_type=jnp.float32)          # (Bt, 3H)
        rz = jax.nn.sigmoid(gi[:, :2 * H] + gh[:, :2 * H])
        r, z = rz[:, :H], rz[:, H:]
        n = jnp.tanh(gi[:, 2 * H:] + r * (gh[:, 2 * H:] + b_hn))
        h_new = n + z * (h - n)                                   # == (1-z)*n + z*h
        hseq_ref[t] = h_new.astype(hseq_ref.dtype)
        return h_new

    # Unrolled for short sequences (LLO scheduling visibility); rolled loop for
    # very long ones to bound code size.
    lax.fori_loop(0, T, step, h0_ref[...].astype(jnp.float32), unroll=(T <= 64))


def meta_gru_sequence(xs, h0, params, *, batch_tile=None):
    """Run the GRU cell over xs: (T, B, in). Returns all hidden states (T, B, H).

    batch_tile: optional batch-tile size; when set (and < B), the recurrence is
    sharded over a "parallel" grid axis of B // batch_tile independent tiles
    (uses both TensorCores on v7x; no effect on v5e/v6e).
    """
    T, B, in_size = xs.shape
    H = h0.shape[-1]
    assert H % 128 == 0, "hidden_size must be a multiple of 128 (lane alignment)"

    # ---- Stage 1: gi = xs @ W_ih^T + folded biases, all T timesteps at once --
    gi = _input_projection(xs.reshape(T * B, in_size), params)
    gi = gi.reshape(T, B, 3 * H)

    whh, bhn = params["w_hh_t"], params["b_hn"]

    if batch_tile is None or batch_tile >= B:
        nbt, bt = 1, B
    else:
        assert B % batch_tile == 0 and batch_tile % 8 == 0, \
            "batch_tile must divide B and be a multiple of 8 (sublane alignment)"
        nbt, bt = B // batch_tile, batch_tile

    est = (_nbytes((T, bt, 3 * H), jnp.float32)        # gi block
           + _nbytes((H, 3 * H), whh.dtype)            # resident W_hh^T
           + _nbytes((T, bt, H), h0.dtype)             # output block
           + 2 * _nbytes((bt, H), jnp.float32))        # h0 + carry
    cparams = dict(vmem_limit_bytes=_vmem_limit_bytes(est))

    if nbt == 1:
        # grid=(): no pipeline machinery at all -> each operand lands in VMEM
        # exactly once (single-buffered), zero per-grid-step overhead.
        grid_spec = pl.GridSpec(
            grid=(),
            in_specs=[_full_spec((T, B, 3 * H)),       # gi
                      _full_spec((B, H)),              # h0
                      _full_spec((H, 3 * H)),          # W_hh^T (resident)
                      _full_spec((1, H))],             # b_hh_n
            out_specs=_full_spec((T, B, H)),
        )
    else:
        vmem = pltpu.MemorySpace.VMEM
        grid_spec = pl.GridSpec(
            grid=(nbt,),
            in_specs=[
                pl.BlockSpec((T, bt, 3 * H), lambda b: (0, b, 0), memory_space=vmem),
                pl.BlockSpec((bt, H), lambda b: (b, 0), memory_space=vmem),
                pl.BlockSpec((H, 3 * H), lambda b: (0, 0), memory_space=vmem),
                pl.BlockSpec((1, H), lambda b: (0, 0), memory_space=vmem),
            ],
            out_specs=pl.BlockSpec((T, bt, H), lambda b: (0, b, 0),
                                   memory_space=vmem),
        )
        cparams["dimension_semantics"] = ("parallel",)   # batch tiles independent

    return pl.pallas_call(
        _gru_seq_kernel,
        out_shape=jax.ShapeDtypeStruct((T, B, H), h0.dtype),
        grid_spec=grid_spec,
        compiler_params=pltpu.CompilerParams(**cparams),
    )(gi, h0, whh, bhn)


# ----------------------------------------------------------------------------
# Pure-JAX reference matching torch._VF.gru_cell.
# ----------------------------------------------------------------------------
def gru_cell_reference(x, hx, weight_ih, weight_hh, bias_ih, bias_hh):
    gi = x @ weight_ih.T + bias_ih
    gh = hx @ weight_hh.T + bias_hh
    H = hx.shape[-1]
    i_r, i_z, i_n = gi[:, :H], gi[:, H:2 * H], gi[:, 2 * H:]
    h_r, h_z, h_n = gh[:, :H], gh[:, H:2 * H], gh[:, 2 * H:]
    r = jax.nn.sigmoid(i_r + h_r)
    z = jax.nn.sigmoid(i_z + h_z)
    n = jnp.tanh(i_n + r * h_n)
    return (1.0 - z) * n + z * hx


if __name__ == "__main__":
    # Small shapes consistent with the module: batch=8, input=64, hidden=128, T=8.
    B, IN, H, T = 8, 64, 128, 8
    key = jax.random.PRNGKey(0)
    (k_x, k_h, k_wih, k_whh, k_bih, k_bhh, k_xs, k_h2, k_xs2) = jax.random.split(key, 9)

    # PyTorch nn.GRUCell-style init: U(-1/sqrt(H), 1/sqrt(H)).
    bound = 1.0 / math.sqrt(H)
    weight_ih = jax.random.uniform(k_wih, (3 * H, IN), jnp.float32, -bound, bound)
    weight_hh = jax.random.uniform(k_whh, (3 * H, H), jnp.float32, -bound, bound)
    bias_ih = jax.random.uniform(k_bih, (3 * H,), jnp.float32, -bound, bound)
    bias_hh = jax.random.uniform(k_bhh, (3 * H,), jnp.float32, -bound, bound)

    x = jax.random.normal(k_x, (B, IN), jnp.float32)
    hx = jax.random.normal(k_h, (B, H), jnp.float32)
    xs = jax.random.normal(k_xs, (T, B, IN), jnp.float32)

    ref = gru_cell_reference(x, hx, weight_ih, weight_hh, bias_ih, bias_hh)

    def scan_reference(xs_, h_):
        def step(h, x_t):
            h_new = gru_cell_reference(x_t, h, weight_ih, weight_hh, bias_ih, bias_hh)
            return h_new, h_new
        _, hs_ = lax.scan(step, h_, xs_)
        return hs_

    # --- single step, f32 params: exact nn.GRUCell semantics -----------------
    params_f32 = prepare_gru_params(weight_ih, weight_hh, bias_ih, bias_hh)
    out = jax.block_until_ready(meta_gru_cell(x, hx, params_f32))
    assert out.shape == (B, H) and out.dtype == hx.dtype
    assert jnp.allclose(out, ref, atol=1e-5, rtol=1e-5), "single-step f32 mismatch"

    # --- single step, bf16 weights (recommended on v6e/v7x) ------------------
    params_bf16 = prepare_gru_params(weight_ih, weight_hh, bias_ih, bias_hh,
                                     param_dtype=jnp.bfloat16)
    out_bf16 = jax.block_until_ready(meta_gru_cell(x, hx, params_bf16))
    assert jnp.allclose(out_bf16, ref, atol=2e-2, rtol=2e-2), "single-step bf16 mismatch"

    # --- fused T-step recurrence, f32, single batch tile (grid=()) -----------
    hs = jax.block_until_ready(meta_gru_sequence(xs, hx, params_f32))
    hs_ref = scan_reference(xs, hx)
    assert hs.shape == (T, B, H)
    assert jnp.allclose(hs, hs_ref, atol=1e-4, rtol=1e-4), "fused sequence f32 mismatch"

    # --- fused recurrence, bf16 weights: recurrent re-quantization drift check
    hs_bf16 = jax.block_until_ready(meta_gru_sequence(xs, hx, params_bf16))
    assert float(jnp.max(jnp.abs(hs_bf16.astype(jnp.float32) - hs_ref))) < 1e-1, \
        "fused sequence bf16 drift too large"

    # --- fused recurrence, batch-tiled "parallel" grid (v7x 2-TC path) -------
    B2 = 16
    hx2 = jax.random.normal(k_h2, (B2, H), jnp.float32)
    xs2 = jax.random.normal(k_xs2, (T, B2, IN), jnp.float32)
    hs2 = jax.block_until_ready(meta_gru_sequence(xs2, hx2, params_f32, batch_tile=8))
    assert jnp.allclose(hs2, scan_reference(xs2, hx2), atol=1e-4, rtol=1e-4), \
        "batch-tiled sequence mismatch"

    print("KERNEL_OK")
</pallas_src>

<mosaic_0001>
module attributes {stable_mosaic.version = 11 : i64} {
  func.func @_gru_cell_kernel(%arg0: memref<8x64xf32, #tpu.memory_space<vmem>>, %arg1: memref<8x128xf32, #tpu.memory_space<vmem>>, %arg2: memref<64x384xf32, #tpu.memory_space<vmem>>, %arg3: memref<128x384xf32, #tpu.memory_space<vmem>>, %arg4: memref<1x256xf32, #tpu.memory_space<vmem>>, %arg5: memref<1x128xf32, #tpu.memory_space<vmem>>, %arg6: memref<1x128xf32, #tpu.memory_space<vmem>>, %arg7: memref<8x128xf32, #tpu.memory_space<vmem>>) attributes {dimension_semantics = [], scalar_prefetch = 0 : i64, scratch_operands = 0 : i64, tpu.core_type = #tpu.core_type<tc>} {
    %c0 = arith.constant 0 : index
    %c0_0 = arith.constant 0 : index
    %0 = vector.load %arg1[%c0, %c0_0] : memref<8x128xf32, #tpu.memory_space<vmem>>, vector<8x128xf32>
    %c0_1 = arith.constant 0 : index
    %c0_2 = arith.constant 0 : index
    %1 = vector.load %arg0[%c0_1, %c0_2] : memref<8x64xf32, #tpu.memory_space<vmem>>, vector<8x64xf32>
    %c0_3 = arith.constant 0 : index
    %c0_4 = arith.constant 0 : index
    %2 = vector.load %arg2[%c0_3, %c0_4] : memref<64x384xf32, #tpu.memory_space<vmem>>, vector<64x384xf32>
    %cst = arith.constant dense<0.000000e+00> : vector<8x384xf32>
    %3 = tpu.matmul %1, %2, %cst {dimension_numbers = #tpu.dot_dimension_numbers<[1], [0], [0], [1], [0, 0, 1, 1], [], []>} : vector<8x64xf32>, vector<64x384xf32>, vector<8x384xf32> -> vector<8x384xf32>
    %c0_5 = arith.constant 0 : index
    %c0_6 = arith.constant 0 : index
    %4 = vector.load %arg1[%c0_5, %c0_6] : memref<8x128xf32, #tpu.memory_space<vmem>>, vector<8x128xf32>
    %c0_7 = arith.constant 0 : index
    %c0_8 = arith.constant 0 : index
    %5 = vector.load %arg3[%c0_7, %c0_8] : memref<128x384xf32, #tpu.memory_space<vmem>>, vector<128x384xf32>
    %cst_9 = arith.constant dense<0.000000e+00> : vector<8x384xf32>
    %6 = tpu.matmul %4, %5, %cst_9 {dimension_numbers = #tpu.dot_dimension_numbers<[1], [0], [0], [1], [0, 0, 1, 1], [], []>} : vector<8x128xf32>, vector<128x384xf32>, vector<8x384xf32> -> vector<8x384xf32>
    %7 = vector.extract_strided_slice %3 {offsets = [0, 0], sizes = [8, 256], strides = [1, 1]} : vector<8x384xf32> to vector<8x256xf32>
    %8 = vector.extract_strided_slice %6 {offsets = [0, 0], sizes = [8, 256], strides = [1, 1]} : vector<8x384xf32> to vector<8x256xf32>
    %9 = arith.addf %7, %8 : vector<8x256xf32>
    %c0_10 = arith.constant 0 : index
    %c0_11 = arith.constant 0 : index
    %10 = vector.load %arg4[%c0_10, %c0_11] : memref<1x256xf32, #tpu.memory_space<vmem>>, vector<1x256xf32>
    %11 = vector.broadcast %10 : vector<1x256xf32> to vector<8x256xf32>
    %12 = arith.addf %9, %11 : vector<8x256xf32>
    %13 = arith.negf %12 : vector<8x256xf32>
    %14 = math.exp %13 : vector<8x256xf32>
    %cst_12 = arith.constant 1.000000e+00 : f32
    %15 = vector.broadcast %cst_12 : f32 to vector<8x256xf32>
    %16 = arith.addf %15, %14 : vector<8x256xf32>
    %17 = arith.divf %15, %16 : vector<8x256xf32>
    %18 = vector.extract_strided_slice %17 {offsets = [0, 0], sizes = [8, 128], strides = [1, 1]} : vector<8x256xf32> to vector<8x128xf32>
    %19 = vector.extract_strided_slice %17 {offsets = [0, 128], sizes = [8, 128], strides = [1, 1]} : vector<8x256xf32> to vector<8x128xf32>
    %20 = vector.extract_strided_slice %3 {offsets = [0, 256], sizes = [8, 128], strides = [1, 1]} : vector<8x384xf32> to vector<8x128xf32>
    %c0_13 = arith.constant 0 : index
    %c0_14 = arith.constant 0 : index
    %21 = vector.load %arg5[%c0_13, %c0_14] : memref<1x128xf32, #tpu.memory_space<vmem>>, vector<1x128xf32>
    %22 = vector.broadcast %21 : vector<1x128xf32> to vector<8x128xf32>
    %23 = arith.addf %20, %22 : vector<8x128xf32>
    %24 = vector.extract_strided_slice %6 {offsets = [0, 256], sizes = [8, 128], strides = [1, 1]} : vector<8x384xf32> to vector<8x128xf32>
    %c0_15 = arith.constant 0 : index
    %c0_16 = arith.constant 0 : index
    %25 = vector.load %arg6[%c0_15, %c0_16] : memref<1x128xf32, #tpu.memory_space<vmem>>, vector<1x128xf32>
    %26 = vector.broadcast %25 : vector<1x128xf32> to vector<8x128xf32>
    %27 = arith.addf %24, %26 : vector<8x128xf32>
    %28 = arith.mulf %18, %27 : vector<8x128xf32>
    %29 = arith.addf %23, %28 : vector<8x128xf32>
    %30 = math.tanh %29 : vector<8x128xf32>
    %31 = arith.subf %0, %30 : vector<8x128xf32>
    %32 = arith.mulf %19, %31 : vector<8x128xf32>
    %33 = arith.addf %30, %32 : vector<8x128xf32>
    %c0_17 = arith.constant 0 : index
    %c0_18 = arith.constant 0 : index
    %34 = vector.load %arg7[%c0_17, %c0_18] : memref<8x128xf32, #tpu.memory_space<vmem>>, vector<8x128xf32>
    tpu.vector_store %arg7[%c0_17, %c0_18], %33 {strides = array<i32>} : memref<8x128xf32, #tpu.memory_space<vmem>>, vector<8x128xf32>,
    return
  }
}

</mosaic_0001>

<llo_original>
// kernel: tpu_custom_call.1
$region0: #{tpu_custom_call.1}
  #allocation0 [shape = 'u32[]', space=smem, size = 0x4, offset = 0x4, fixed_abs, tag = 'smem constant byte address 0x4 - core index']
  #allocation1 [shape = 'u32[144,128]{1,0:T(1,128)}', space=vmem, size = 0x12000, scoped, tag = 'internal scratch']
  %s0 = inlined_call_operand.hbm [shape: f32[8,64], index: 0, kind: input, shape index: {}]
  %s1 = inlined_call_operand.hbm [shape: f32[8,128], index: 1, kind: input, shape index: {}]
  %s2 = inlined_call_operand.hbm [shape: f32[64,384], index: 2, kind: input, shape index: {}]
  %s3 = inlined_call_operand.hbm [shape: f32[128,384], index: 3, kind: input, shape index: {}]
  %s4 = inlined_call_operand.vmem [shape: f32[1,256], index: 4, kind: input, shape index: {}]
  %s5 = inlined_call_operand.vmem [shape: f32[1,128], index: 5, kind: input, shape index: {}]
  %s6 = inlined_call_operand.vmem [shape: f32[1,128], index: 6, kind: input, shape index: {}]
  %s7 = inlined_call_operand.hbm [shape: f32[8,128], index: 7, kind: output, shape index: {}]
  %s8 = sld [smem:[#allocation0]]
  $region54: #{tpu_custom_call.1} parent=0
    _
  %s10 = ssub.s32 1, %s8
  %s11 = scalar_select 0, %s10, %s8
  $region1: #{tpu_custom_call.1} parent=0
    #allocation2 [shape = 'u8[4096]{0}', space=vmem, size = 0x1000, scoped, tag = 'input window, operand 0, single buffered']
    #allocation3 [shape = 's32[1]{0}', space=sflag, size = 0x4, scoped, tag = 'scoped memory for tpu_custom_call.1']
    #allocation4 [shape = 's32[1]{0}', space=sflag, size = 0x4, scoped, tag = 'scoped memory for tpu_custom_call.1']
    #allocation5 [shape = 'u8[4096]{0}', space=vmem, size = 0x1000, scoped, tag = 'input window, operand 1, single buffered']
    #allocation6 [shape = 's32[1]{0}', space=sflag, size = 0x4, scoped, tag = 'scoped memory for tpu_custom_call.1']
    #allocation7 [shape = 'u8[98304]{0}', space=vmem, size = 0x18000, scoped, tag = 'input window, operand 2, single buffered']
    #allocation8 [shape = 'u8[196608]{0}', space=vmem, size = 0x30000, scoped, tag = 'input window, operand 3, single buffered']
    #allocation9 [shape = 's32[1]{0}', space=sflag, size = 0x4, scoped, tag = 'scoped memory for tpu_custom_call.1']
    #allocation10 [shape = 'u8[4096]{0}', space=vmem, size = 0x1000, scoped, tag = 'output window, operand 0, single buffered']
    %12 = vsyncpa [#allocation3], 0
    %13 = vsyncpa [#allocation6], 0
    %14 = vsyncpa [#allocation9], 0
    %15 = vsyncpa [#allocation4], 0
    // Predicated region
    $region2: #{tpu_custom_call.1} parent=1 // pred_check
      _
    $region3: #{tpu_custom_call.1} parent=1 // pred_check_branch
      %17 = sbr.rel (0) target = $region5
    $region4: #{tpu_custom_call.1} parent=1 // pred_region
      %s19 = ssub.s32 128, 128
      %20 = vsyncadd [#allocation3], %s19
      %s22 = sshll.u32 [#allocation2], 4
      %s23 = int_to_ptr.vmem [resolvable:$true] %s22
      %25 = dma.hbm_to_vmem [thread:$0]  %s0, 128, %s23, [#allocation3]
    $region5: #{tpu_custom_call.1} parent=1 // pred_fallthru
      _
    // Predicated region
    $region6: #{tpu_custom_call.1} parent=1 // pred_check
      _
    $region7: #{tpu_custom_call.1} parent=1 // pred_check_branch
      %27 = sbr.rel (0) target = $region9
    $region8: #{tpu_custom_call.1} parent=1 // pred_region
      %s29 = ssub.s32 128, 128
      %30 = vsyncadd [#allocation6], %s29
      %s32 = sshll.u32 [#allocation5], 4
      %s33 = int_to_ptr.vmem [resolvable:$true] %s32
      %35 = dma.hbm_to_vmem [thread:$0]  %s1, 128, %s33, [#allocation6]
    $region9: #{tpu_custom_call.1} parent=1 // pred_fallthru
      _
    // Predicated region
    $region10: #{tpu_custom_call.1} parent=1 // pred_check
      _
    $region11: #{tpu_custom_call.1} parent=1 // pred_check_branch
      %37 = sbr.rel (0) target = $region13
    $region12: #{tpu_custom_call.1} parent=1 // pred_region
      %s39 = ssub.s32 3072, 3072
      %40 = vsyncadd [#allocation6], %s39
      %s41 = sshll.u32 [#allocation7], 4
      %s42 = int_to_ptr.vmem [resolvable:$true] %s41
      %47 = dma.hbm_to_vmem [thread:$0]  %s2, 3072, %s42, [#allocation6], 384, 384, 24
    $region13: #{tpu_custom_call.1} parent=1 // pred_fallthru
      _
    // Predicated region
    $region14: #{tpu_custom_call.1} parent=1 // pred_check
      _
    $region15: #{tpu_custom_call.1} parent=1 // pred_check_branch
      %49 = sbr.rel (0) target = $region17
    $region16: #{tpu_custom_call.1} parent=1 // pred_region
      %s51 = ssub.s32 6144, 6144
      %52 = vsyncadd [#allocation9], %s51
      %s53 = sshll.u32 [#allocation8], 4
      %s54 = int_to_ptr.vmem [resolvable:$true] %s53
      %59 = dma.hbm_to_vmem [thread:$0]  %s3, 6144, %s54, [#allocation9], 384, 384, 24
    $region17: #{tpu_custom_call.1} parent=1 // pred_fallthru
      _
    // Predicated region
    $region18: #{tpu_custom_call.1} parent=1 // pred_check
      _
    $region19: #{tpu_custom_call.1} parent=1 // pred_check_branch
      %61 = sbr.rel (0) target = $region21
    $region20: #{tpu_custom_call.1} parent=1 // pred_region
      _
    $region21: #{tpu_custom_call.1} parent=1 // pred_fallthru
      _
    // Predicated region
    $region22: #{tpu_custom_call.1} parent=1 // pred_check
      _
    $region23: #{tpu_custom_call.1} parent=1 // pred_check_branch
      %63 = sbr.rel (0) target = $region25
    $region24: #{tpu_custom_call.1} parent=1 // pred_region
      _
    $region25: #{tpu_custom_call.1} parent=1 // pred_fallthru
      _
    // Predicated region
    $region26: #{tpu_custom_call.1} parent=1 // pred_check
      _
    $region27: #{tpu_custom_call.1} parent=1 // pred_check_branch
      %65 = sbr.rel (0) target = $region29
    $region28: #{tpu_custom_call.1} parent=1 // pred_region
      _
    $region29: #{tpu_custom_call.1} parent=1 // pred_fallthru
      _
    // Predicated region
    $region30: #{tpu_custom_call.1} parent=1 // pred_check
      _
    $region31: #{tpu_custom_call.1} parent=1 // pred_check_branch
      %67 = sbr.rel (0) target = $region33
    $region32: #{tpu_custom_call.1} parent=1 // pred_region
      %68 = dma.done [#allocation3], 128
    $region33: #{tpu_custom_call.1} parent=1 // pred_fallthru
      _
    // Predicated region
    $region34: #{tpu_custom_call.1} parent=1 // pred_check
      _
    $region35: #{tpu_custom_call.1} parent=1 // pred_check_branch
      %70 = sbr.rel (0) target = $region37
    $region36: #{tpu_custom_call.1} parent=1 // pred_region
      %71 = dma.done [#allocation6], 128
    $region37: #{tpu_custom_call.1} parent=1 // pred_fallthru
      _
    // Predicated region
    $region38: #{tpu_custom_call.1} parent=1 // pred_check
      _
    $region39: #{tpu_custom_call.1} parent=1 // pred_check_branch
      %73 = sbr.rel (0) target = $region41
    $region40: #{tpu_custom_call.1} parent=1 // pred_region
      %74 = dma.done [#allocation6], 3072
    $region41: #{tpu_custom_call.1} parent=1 // pred_fallthru
      _
    // Predicated region
    $region42: #{tpu_custom_call.1} parent=1 // pred_check
      _
    $region43: #{tpu_custom_call.1} parent=1 // pred_check_branch
      %76 = sbr.rel (0) target = $region45
    $region44: #{tpu_custom_call.1} parent=1 // pred_region
      %77 = dma.done [#allocation9], 6144
    $region45: #{tpu_custom_call.1} parent=1 // pred_fallthru
      _
    %v78 = vld [vmem:[#allocation5] sm:$0xff]
    %v79 = vld [vmem:[#allocation2] sm:$0xff]
    %v80 = vld [vmem:[#allocation7] sm:$0xff]
    %v81 = vld [vmem:[#allocation7 + $0x8] sm:$0xff]
    %v82 = vld [vmem:[#allocation7 + $0x10] sm:$0xff]
    %v83 = vld [vmem:[#allocation7 + $0x18] sm:$0xff]
    %v84 = vld [vmem:[#allocation7 + $0x20] sm:$0xff]
    %v85 = vld [vmem:[#allocation7 + $0x28] sm:$0xff]
    %v86 = vld [vmem:[#allocation7 + $0x30] sm:$0xff]
    %v87 = vld [vmem:[#allocation7 + $0x38] sm:$0xff]
    %v88 = vld [vmem:[#allocation7 + $0x40] sm:$0xff]
    %v89 = vld [vmem:[#allocation7 + $0x48] sm:$0xff]
    %v90 = vld [vmem:[#allocation7 + $0x50] sm:$0xff]
    %v91 = vld [vmem:[#allocation7 + $0x58] sm:$0xff]
    %v92 = vld [vmem:[#allocation7 + $0x60] sm:$0xff]
    %v93 = vld [vmem:[#allocation7 + $0x68] sm:$0xff]
    %v94 = vld [vmem:[#allocation7 + $0x70] sm:$0xff]
    %v95 = vld [vmem:[#allocation7 + $0x78] sm:$0xff]
    %v96 = vld [vmem:[#allocation7 + $0x80] sm:$0xff]
    %v97 = vld [vmem:[#allocation7 + $0x88] sm:$0xff]
    %v98 = vld [vmem:[#allocation7 + $0x90] sm:$0xff]
    %v99 = vld [vmem:[#allocation7 + $0x98] sm:$0xff]
    %v100 = vld [vmem:[#allocation7 + $0xa0] sm:$0xff]
    %v101 = vld [vmem:[#allocation7 + $0xa8] sm:$0xff]
    %v102 = vld [vmem:[#allocation7 + $0xb0] sm:$0xff]
    %v103 = vld [vmem:[#allocation7 + $0xb8] sm:$0xff]
    %vm104 = vcmask 523264
    %v106 = vsel %vm104, %v79, 0
    %108 = vmatprep.subr.mxu0 0.0
    %109 = vmatpush1.msra.mxu0 0.0
    %110 = vmatprep.subr.mxu0 0.0
    %111 = vmatpush1.msra.mxu0 0.0
    %112 = vmatprep.subr.mxu0 0.0
    %113 = vmatpush1.msra.mxu0 0.0
    %114 = vmatprep.subr.mxu0 0.0
    %115 = vmatpush1.msra.mxu0 0.0
    %116 = vmatprep.subr.mxu0 0.0
    %117 = vmatpush1.msra.mxu0 0.0
    %118 = vmatprep.subr.mxu0 0.0
    %119 = vmatpush1.msra.mxu0 0.0
    %120 = vmatprep.subr.mxu0 0.0
    %121 = vmatpush1.msra.mxu0 0.0
    %122 = vmatprep.subr.mxu0 0.0
    %123 = vmatpush1.msra.mxu0 0.0
    %124 = vmatprep.subr.mxu0 %v102
    %125 = vmatpush1.msra.mxu0 %v101
    %126 = vmatprep.subr.mxu0 %v99
    %127 = vmatpush1.msra.mxu0 %v98
    %128 = vmatprep.subr.mxu0 %v96
    %129 = vmatpush1.msra.mxu0 %v95
    %130 = vmatprep.subr.mxu0 %v93
    %131 = vmatpush1.msra.mxu0 %v92
    %132 = vmatprep.subr.mxu0 %v90
    %133 = vmatpush1.msra.mxu0 %v89
    %134 = vmatprep.subr.mxu0 %v87
    %135 = vmatpush1.msra.mxu0 %v86
    %136 = vmatprep.subr.mxu0 %v84
    %137 = vmatpush1.msra.mxu0 %v83
    %138 = vmatprep.subr.mxu0 %v81
    %139 = vmatpush1.msra.mxu0 %v80
    %140 = vmatprep.subr.mxu0 0.0
    %141 = vmatpush2.msra.mxu0 0.0
    %142 = vmatprep.subr.mxu0 0.0
    %143 = vmatpush2.msra.mxu0 0.0
    %144 = vmatprep.subr.mxu0 0.0
    %145 = vmatpush2.msra.mxu0 0.0
    %146 = vmatprep.subr.mxu0 0.0
    %147 = vmatpush2.msra.mxu0 0.0
    %148 = vmatprep.subr.mxu0 0.0
    %149 = vmatpush2.msra.mxu0 0.0
    %150 = vmatprep.subr.mxu0 0.0
    %151 = vmatpush2.msra.mxu0 0.0
    %152 = vmatprep.subr.mxu0 0.0
    %153 = vmatpush2.msra.mxu0 0.0
    %154 = vmatprep.subr.mxu0 0.0
    %155 = vmatpush2.msra.mxu0 0.0
    %156 = vmatprep.subr.mxu0 0.0
    %157 = vmatpush2.msra.mxu0 0.0
    %158 = vmatprep.subr.mxu0 0.0
    %159 = vmatpush2.msra.mxu0 0.0
    %160 = vmatprep.subr.mxu0 0.0
    %161 = vmatpush2.msra.mxu0 0.0
    %162 = vmatprep.subr.mxu0 0.0
    %163 = vmatpush2.msra.mxu0 0.0
    %164 = vmatprep.subr.mxu0 0.0
    %165 = vmatpush2.msra.mxu0 0.0
    %166 = vmatprep.subr.mxu0 0.0
    %167 = vmatpush2.msra.mxu0 0.0
    %168 = vmatprep.subr.mxu0 0.0
    %169 = vmatpush2.msra.mxu0 0.0
    %170 = vmatprep.subr.mxu0 0.0
    %171 = vmatpush2.msra.mxu0 0.0
    %172 = vmatprep.mubr.f32.mxu0 0.0
    %173 = vmatmul.mubr.f32.gmra.mxu0 %v106
    %v174 = vpop.f32.mrf.mxu0
    %v175 = vadd.f32 0.0, %v174
    %v176 = vpop.f32.mrf.mxu0
    %v177 = vadd.f32 0.0, %v176
    %178 = vdwg.mxu0
    %179 = vmatprep.subr.mxu0 0.0
    %180 = vmatpush1.msra.mxu0 0.0
    %181 = vmatprep.subr.mxu0 0.0
    %182 = vmatpush1.msra.mxu0 0.0
    %183 = vmatprep.subr.mxu0 0.0
    %184 = vmatpush1.msra.mxu0 0.0
    %185 = vmatprep.subr.mxu0 0.0
    %186 = vmatpush1.msra.mxu0 0.0
    %187 = vmatprep.subr.mxu0 0.0
    %188 = vmatpush1.msra.mxu0 0.0
    %189 = vmatprep.subr.mxu0 0.0
    %190 = vmatpush1.msra.mxu0 0.0
    %191 = vmatprep.subr.mxu0 0.0
    %192 = vmatpush1.msra.mxu0 0.0
    %193 = vmatprep.subr.mxu0 0.0
    %194 = vmatpush1.msra.mxu0 0.0
    %195 = vmatprep.subr.mxu0 0.0
    %196 = vmatpush1.msra.mxu0 %v103
    %197 = vmatprep.subr.mxu0 0.0
    %198 = vmatpush1.msra.mxu0 %v100
    %199 = vmatprep.subr.mxu0 0.0
    %200 = vmatpush1.msra.mxu0 %v97
    %201 = vmatprep.subr.mxu0 0.0
    %202 = vmatpush1.msra.mxu0 %v94
    %203 = vmatprep.subr.mxu0 0.0
    %204 = vmatpush1.msra.mxu0 %v91
    %205 = vmatprep.subr.mxu0 0.0
    %206 = vmatpush1.msra.mxu0 %v88
    %207 = vmatprep.subr.mxu0 0.0
    %208 = vmatpush1.msra.mxu0 %v85
    %209 = vmatprep.subr.mxu0 0.0
    %210 = vmatpush1.msra.mxu0 %v82
    %211 = vmatprep.subr.mxu0 0.0
    %212 = vmatpush2.msra.mxu0 0.0
    %213 = vmatprep.subr.mxu0 0.0
    %214 = vmatpush2.msra.mxu0 0.0
    %215 = vmatprep.subr.mxu0 0.0
    %216 = vmatpush2.msra.mxu0 0.0
    %217 = vmatprep.subr.mxu0 0.0
    %218 = vmatpush2.msra.mxu0 0.0
    %219 = vmatprep.subr.mxu0 0.0
    %220 = vmatpush2.msra.mxu0 0.0
    %221 = vmatprep.subr.mxu0 0.0
    %222 = vmatpush2.msra.mxu0 0.0
    %223 = vmatprep.subr.mxu0 0.0
    %224 = vmatpush2.msra.mxu0 0.0
    %225 = vmatprep.subr.mxu0 0.0
    %226 = vmatpush2.msra.mxu0 0.0
    %227 = vmatprep.subr.mxu0 0.0
    %228 = vmatpush2.msra.mxu0 0.0
    %229 = vmatprep.subr.mxu0 0.0
    %230 = vmatpush2.msra.mxu0 0.0
    %231 = vmatprep.subr.mxu0 0.0
    %232 = vmatpush2.msra.mxu0 0.0
    %233 = vmatprep.subr.mxu0 0.0
    %234 = vmatpush2.msra.mxu0 0.0
    %235 = vmatprep.subr.mxu0 0.0
    %236 = vmatpush2.msra.mxu0 0.0
    %237 = vmatprep.subr.mxu0 0.0
    %238 = vmatpush2.msra.mxu0 0.0
    %239 = vmatprep.subr.mxu0 0.0
    %240 = vmatpush2.msra.mxu0 0.0
    %241 = vmatprep.subr.mxu0 0.0
    %242 = vmatpush2.msra.mxu0 0.0
    %243 = vmatprep.mubr.f32.mxu0 0.0
    %244 = vmatmul.mubr.f32.gmra.mxu0 %v106
    %v245 = vpop.f32.mrf.mxu0
    %v246 = vadd.f32 0.0, %v245
    %v247 = vpop.f32.mrf.mxu0
    %248 = vdwg.mxu0
    %v249 = vld [vmem:[#allocation8] sm:$0xff]
    %v250 = vld [vmem:[#allocation8 + $0x8] sm:$0xff]
    %v251 = vld [vmem:[#allocation8 + $0x10] sm:$0xff]
    %v252 = vld [vmem:[#allocation8 + $0x18] sm:$0xff]
    %v253 = vld [vmem:[#allocation8 + $0x20] sm:$0xff]
    %v254 = vld [vmem:[#allocation8 + $0x28] sm:$0xff]
    %v255 = vld [vmem:[#allocation8 + $0x30] sm:$0xff]
    %v256 = vld [vmem:[#allocation8 + $0x38] sm:$0xff]
    %v257 = vld [vmem:[#allocation8 + $0x40] sm:$0xff]
    %v258 = vld [vmem:[#allocation8 + $0x48] sm:$0xff]
    %v259 = vld [vmem:[#allocation8 + $0x50] sm:$0xff]
    %v260 = vld [vmem:[#allocation8 + $0x58] sm:$0xff]
    %v261 = vld [vmem:[#allocation8 + $0x60] sm:$0xff]
    %v262 = vld [vmem:[#allocation8 + $0x68] sm:$0xff]
    %v263 = vld [vmem:[#allocation8 + $0x70] sm:$0xff]
    %v264 = vld [vmem:[#allocation8 + $0x78] sm:$0xff]
    %v265 = vld [vmem:[#allocation8 + $0x80] sm:$0xff]
    %v266 = vld [vmem:[#allocation8 + $0x88] sm:$0xff]
    %v267 = vld [vmem:[#allocation8 + $0x90] sm:$0xff]
    %v268 = vld [vmem:[#allocation8 + $0x98] sm:$0xff]
    %v269 = vld [vmem:[#allocation8 + $0xa0] sm:$0xff]
    %v270 = vld [vmem:[#allocation8 + $0xa8] sm:$0xff]
    %v271 = vld [vmem:[#allocation8 + $0xb0] sm:$0xff]
    %v272 = vld [vmem:[#allocation8 + $0xb8] sm:$0xff]
    %v273 = vld [vmem:[#allocation8 + $0xc0] sm:$0xff]
    %v274 = vld [vmem:[#allocation8 + $0xc8] sm:$0xff]
    %v275 = vld [vmem:[#allocation8 + $0xd0] sm:$0xff]
    %v276 = vld [vmem:[#allocation8 + $0xd8] sm:$0xff]
    %v277 = vld [vmem:[#allocation8 + $0xe0] sm:$0xff]
    %v278 = vld [vmem:[#allocation8 + $0xe8] sm:$0xff]
    %v279 = vld [vmem:[#allocation8 + $0xf0] sm:$0xff]
    %v280 = vld [vmem:[#allocation8 + $0xf8] sm:$0xff]
    %v281 = vld [vmem:[#allocation8 + $0x100] sm:$0xff]
    %v282 = vld [vmem:[#allocation8 + $0x108] sm:$0xff]
    %v283 = vld [vmem:[#allocation8 + $0x110] sm:$0xff]
    %v284 = vld [vmem:[#allocation8 + $0x118] sm:$0xff]
    %v285 = vld [vmem:[#allocation8 + $0x120] sm:$0xff]
    %v286 = vld [vmem:[#allocation8 + $0x128] sm:$0xff]
    %v287 = vld [vmem:[#allocation8 + $0x130] sm:$0xff]
    %v288 = vld [vmem:[#allocation8 + $0x138] sm:$0xff]
    %v289 = vld [vmem:[#allocation8 + $0x140] sm:$0xff]
    %v290 = vld [vmem:[#allocation8 + $0x148] sm:$0xff]
    %v291 = vld [vmem:[#allocation8 + $0x150] sm:$0xff]
    %v292 = vld [vmem:[#allocation8 + $0x158] sm:$0xff]
    %v293 = vld [vmem:[#allocation8 + $0x160] sm:$0xff]
    %v294 = vld [vmem:[#allocation8 + $0x168] sm:$0xff]
    %v295 = vld [vmem:[#allocation8 + $0x170] sm:$0xff]
    %v296 = vld [vmem:[#allocation8 + $0x178] sm:$0xff]
    %297 = vmatprep.subr.mxu0 %v295
    %298 = vmatpush1.msra.mxu0 %v294
    %299 = vmatprep.subr.mxu0 %v292
    %300 = vmatpush1.msra.mxu0 %v291
    %301 = vmatprep.subr.mxu0 %v289
    %302 = vmatpush1.msra.mxu0 %v288
    %303 = vmatprep.subr.mxu0 %v286
    %304 = vmatpush1.msra.mxu0 %v285
    %305 = vmatprep.subr.mxu0 %v283
    %306 = vmatpush1.msra.mxu0 %v282
    %307 = vmatprep.subr.mxu0 %v280
    %308 = vmatpush1.msra.mxu0 %v279
    %309 = vmatprep.subr.mxu0 %v277
    %310 = vmatpush1.msra.mxu0 %v276
    %311 = vmatprep.subr.mxu0 %v274
    %312 = vmatpush1.msra.mxu0 %v273
    %313 = vmatprep.subr.mxu0 %v271
    %314 = vmatpush1.msra.mxu0 %v270
    %315 = vmatprep.subr.mxu0 %v268
    %316 = vmatpush1.msra.mxu0 %v267
    %317 = vmatprep.subr.mxu0 %v265
    %318 = vmatpush1.msra.mxu0 %v264
    %319 = vmatprep.subr.mxu0 %v262
    %320 = vmatpush1.msra.mxu0 %v261
    %321 = vmatprep.subr.mxu0 %v259
    %322 = vmatpush1.msra.mxu0 %v258
    %323 = vmatprep.subr.mxu0 %v256
    %324 = vmatpush1.msra.mxu0 %v255
    %325 = vmatprep.subr.mxu0 %v253
    %326 = vmatpush1.msra.mxu0 %v252
    %327 = vmatprep.subr.mxu0 %v250
    %328 = vmatpush1.msra.mxu0 %v249
    %329 = vmatprep.subr.mxu0 0.0
    %330 = vmatpush2.msra.mxu0 0.0
    %331 = vmatprep.subr.mxu0 0.0
    %332 = vmatpush2.msra.mxu0 0.0
    %333 = vmatprep.subr.mxu0 0.0
    %334 = vmatpush2.msra.mxu0 0.0
    %335 = vmatprep.subr.mxu0 0.0
    %336 = vmatpush2.msra.mxu0 0.0
    %337 = vmatprep.subr.mxu0 0.0
    %338 = vmatpush2.msra.mxu0 0.0
    %339 = vmatprep.subr.mxu0 0.0
    %340 = vmatpush2.msra.mxu0 0.0
    %341 = vmatprep.subr.mxu0 0.0
    %342 = vmatpush2.msra.mxu0 0.0
    %343 = vmatprep.subr.mxu0 0.0
    %344 = vmatpush2.msra.mxu0 0.0
    %345 = vmatprep.subr.mxu0 0.0
    %346 = vmatpush2.msra.mxu0 0.0
    %347 = vmatprep.subr.mxu0 0.0
    %348 = vmatpush2.msra.mxu0 0.0
    %349 = vmatprep.subr.mxu0 0.0
    %350 = vmatpush2.msra.mxu0 0.0
    %351 = vmatprep.subr.mxu0 0.0
    %352 = vmatpush2.msra.mxu0 0.0
    %353 = vmatprep.subr.mxu0 0.0
    %354 = vmatpush2.msra.mxu0 0.0
    %355 = vmatprep.subr.mxu0 0.0
    %356 = vmatpush2.msra.mxu0 0.0
    %357 = vmatprep.subr.mxu0 0.0
    %358 = vmatpush2.msra.mxu0 0.0
    %359 = vmatprep.subr.mxu0 0.0
    %360 = vmatpush2.msra.mxu0 0.0
    %361 = vmatprep.mubr.f32.mxu0 0.0
    %362 = vmatmul.mubr.f32.gmra.mxu0 %v78
    %v363 = vpop.f32.mrf.mxu0
    %v364 = vadd.f32 0.0, %v363
    %v365 = vpop.f32.mrf.mxu0
    %v366 = vadd.f32 0.0, %v365
    %367 = vdwg.mxu0
    %368 = vmatprep.subr.mxu0 0.0
    %369 = vmatpush1.msra.mxu0 %v296
    %370 = vmatprep.subr.mxu0 0.0
    %371 = vmatpush1.msra.mxu0 %v293
    %372 = vmatprep.subr.mxu0 0.0
    %373 = vmatpush1.msra.mxu0 %v290
    %374 = vmatprep.subr.mxu0 0.0
    %375 = vmatpush1.msra.mxu0 %v287
    %376 = vmatprep.subr.mxu0 0.0
    %377 = vmatpush1.msra.mxu0 %v284
    %378 = vmatprep.subr.mxu0 0.0
    %379 = vmatpush1.msra.mxu0 %v281
    %380 = vmatprep.subr.mxu0 0.0
    %381 = vmatpush1.msra.mxu0 %v278
    %382 = vmatprep.subr.mxu0 0.0
    %383 = vmatpush1.msra.mxu0 %v275
    %384 = vmatprep.subr.mxu0 0.0
    %385 = vmatpush1.msra.mxu0 %v272
    %386 = vmatprep.subr.mxu0 0.0
    %387 = vmatpush1.msra.mxu0 %v269
    %388 = vmatprep.subr.mxu0 0.0
    %389 = vmatpush1.msra.mxu0 %v266
    %390 = vmatprep.subr.mxu0 0.0
    %391 = vmatpush1.msra.mxu0 %v263
    %392 = vmatprep.subr.mxu0 0.0
    %393 = vmatpush1.msra.mxu0 %v260
    %394 = vmatprep.subr.mxu0 0.0
    %395 = vmatpush1.msra.mxu0 %v257
    %396 = vmatprep.subr.mxu0 0.0
    %397 = vmatpush1.msra.mxu0 %v254
    %398 = vmatprep.subr.mxu0 0.0
    %399 = vmatpush1.msra.mxu0 %v251
    %400 = vmatprep.subr.mxu0 0.0
    %401 = vmatpush2.msra.mxu0 0.0
    %402 = vmatprep.subr.mxu0 0.0
    %403 = vmatpush2.msra.mxu0 0.0
    %404 = vmatprep.subr.mxu0 0.0
    %405 = vmatpush2.msra.mxu0 0.0
    %406 = vmatprep.subr.mxu0 0.0
    %407 = vmatpush2.msra.mxu0 0.0
    %408 = vmatprep.subr.mxu0 0.0
    %409 = vmatpush2.msra.mxu0 0.0
    %410 = vmatprep.subr.mxu0 0.0
    %411 = vmatpush2.msra.mxu0 0.0
    %412 = vmatprep.subr.mxu0 0.0
    %413 = vmatpush2.msra.mxu0 0.0
    %414 = vmatprep.subr.mxu0 0.0
    %415 = vmatpush2.msra.mxu0 0.0
    %416 = vmatprep.subr.mxu0 0.0
    %417 = vmatpush2.msra.mxu0 0.0
    %418 = vmatprep.subr.mxu0 0.0
    %419 = vmatpush2.msra.mxu0 0.0
    %420 = vmatprep.subr.mxu0 0.0
    %421 = vmatpush2.msra.mxu0 0.0
    %422 = vmatprep.subr.mxu0 0.0
    %423 = vmatpush2.msra.mxu0 0.0
    %424 = vmatprep.subr.mxu0 0.0
    %425 = vmatpush2.msra.mxu0 0.0
    %426 = vmatprep.subr.mxu0 0.0
    %427 = vmatpush2.msra.mxu0 0.0
    %428 = vmatprep.subr.mxu0 0.0
    %429 = vmatpush2.msra.mxu0 0.0
    %430 = vmatprep.subr.mxu0 0.0
    %431 = vmatpush2.msra.mxu0 0.0
    %432 = vmatprep.mubr.f32.mxu0 0.0
    %433 = vmatmul.mubr.f32.gmra.mxu0 %v78
    %v434 = vpop.f32.mrf.mxu0
    %v435 = vadd.f32 0.0, %v434
    %v436 = vpop.f32.mrf.mxu0
    %437 = vdwg.mxu0
    %v438 = vadd.f32 %v175, %v364
    %v439 = vadd.f32 %v177, %v366
    %v440 = vld [vmem:[%s4] sm:$0x3]
    %v442 = vlaneseq
    %v443 = vshrl.u32 %v442, 7
    %v444 = vsub.s32 0, %v443
    %v445 = vrot.slane %v440, %v444
    %v446 = vlaneseq
    %v447 = vshrl.u32 %v446, 7
    %v448 = vsub.s32 1, %v447
    %v449 = vrot.slane %v440, %v448
    %v452 = vadd.f32 %v438, %v445
    %v453 = vadd.f32 %v439, %v449
    %v454 = vxor.u32 %v452, 2147483648
    %v455 = vxor.u32 %v453, 2147483648
    %v456 = vmul.f32 %v454, 1.442695
    %v457 = vpow.pop %v456
    %v458 = vmul.f32 %v455, 1.442695
    %v459 = vpow.pop %v458
    %v460 = vadd.f32 %v457, 1.0
    %v461 = vadd.f32 %v459, 1.0
    %v462 = vrcp.pop %v460
    %v463 = vmul.f32 1.0, %v462
    %v464 = vrcp.pop %v461
    %v465 = vmul.f32 1.0, %v464
    %v466 = vld [vmem:[%s5] sm:$0x1]
    %v468 = vlaneseq
    %v469 = vshrl.u32 %v468, 7
    %v470 = vsub.s32 0, %v469
    %v471 = vrot.slane %v466, %v470
    %v473 = vadd.f32 %v246, %v471
    %v474 = vld [vmem:[%s6] sm:$0x1]
    %v476 = vlaneseq
    %v477 = vshrl.u32 %v476, 7
    %v478 = vsub.s32 0, %v477
    %v479 = vrot.slane %v474, %v478
    %v481 = vadd.f32 %v435, %v479
    %v482 = vmul.f32 %v463, %v481
    %v483 = vadd.f32 %v473, %v482
    %v484 = vtanh.pop %v483
    %v485 = vsub.f32 %v78, %v484
    %v486 = vmul.f32 %v465, %v485
    %v487 = vadd.f32 %v484, %v486
    %488 = vst [vmem:[#allocation10] sm:$0xff] %v487
    // Predicated region
    $region46: #{tpu_custom_call.1} parent=1 // pred_check
      _
    $region47: #{tpu_custom_call.1} parent=1 // pred_check_branch
      %490 = sbr.rel (0) target = $region49
    $region48: #{tpu_custom_call.1} parent=1 // pred_region
      %s492 = ssub.s32 128, 128
      %493 = vsyncadd [#allocation4], %s492
      %s495 = sshll.u32 [#allocation10], 4
      %s496 = int_to_ptr.vmem [resolvable:$true] %s495
      %498 = dma.vmem_to_hbm [thread:$0]  %s496, 128, %s7, [#allocation4]
    $region49: #{tpu_custom_call.1} parent=1 // pred_fallthru
      _
    // Predicated region
    $region50: #{tpu_custom_call.1} parent=1 // pred_check
      _
    $region51: #{tpu_custom_call.1} parent=1 // pred_check_branch
      %500 = sbr.rel (0) target = $region53
    $region52: #{tpu_custom_call.1} parent=1 // pred_region
      %501 = dma.done [#allocation4], 128
    $region53: #{tpu_custom_call.1} parent=1 // pred_fallthru
      _
    %502 = vsyncpa [#allocation3], 1
    %503 = vsyncpa [#allocation6], 1
    %504 = vsyncpa [#allocation9], 1
    %505 = vsyncpa [#allocation4], 1

</llo_original>
